<compile_context>
chip_gen: v7x
topology: tpu7x:2x2x1
jax: 0.10.0
libtpu: 0.0.40
codegen_flags: <defaults>
</compile_context>

<pallas_src>
import jax
import jax.numpy as jnp
from jax.experimental import pallas as pl
from jax.experimental.pallas import tpu as pltpu

N_STATES = 4     # e.g. CartPole observation size
N_ACTIONS = 2    # e.g. CartPole action count
HIDDEN = 50

HID_PAD = 128    # hidden dim padded 50 -> 128 (lane-dense fc1 output / fc2 input)
OUT_PAD = 8      # Q output padded 2 -> 8 lanes (full-extent last dim)
MAX_TB = 2048    # batch tile cap for large training/eval batches
SPLIT_B = 1024   # above this, use >=2 tiles so v7x's 2 TCs split the batch


def _round_up(n, m):
    return ((n + m - 1) // m) * m


def _batch_tile(B):
    if B > SPLIT_B:
        return min(MAX_TB, _round_up(-(-B // 2), 8))
    return _round_up(max(B, 1), 8)


def _mlp_compute(x_ref, w1_ref, b1_ref, w2_ref, b2_ref):
    """Shared fc1 -> ReLU -> fc2 -> greedy-argmax body (all f32)."""
    x = x_ref[...]                                                    # (TB, 4)
    h = jnp.dot(x, w1_ref[...], preferred_element_type=jnp.float32) + b1_ref[...]
    h = jnp.maximum(h, 0.0)                                           # (TB, 128)
    q = jnp.dot(h, w2_ref[...], preferred_element_type=jnp.float32) + b2_ref[...]  # (TB, 8)
    # Greedy action over the 8-lane Q block only (cheap epilogue),
    # first-index-of-max semantics matching torch/jnp argmax.
    col = jax.lax.broadcasted_iota(jnp.int32, q.shape, 1)
    valid = col < N_ACTIONS
    qm = jnp.where(valid, q, -jnp.inf)
    qmax = jnp.max(qm, axis=-1, keepdims=True)
    idx = jnp.where(jnp.logical_and(valid, qm >= qmax), col, jnp.int32(OUT_PAD))
    a = jnp.min(idx, axis=-1, keepdims=True)                          # (TB, 1) int32
    return q, a


def _fwd_kernel(x_ref, w1_ref, b1_ref, w2_ref, b2_ref, q_ref, a_ref):
    q, a = _mlp_compute(x_ref, w1_ref, b1_ref, w2_ref, b2_ref)
    q_ref[...] = q
    a_ref[...] = a


def _act_kernel(x_ref, w1_ref, b1_ref, w2_ref, b2_ref, a_ref):
    # Action-only path: skips the Q writeback entirely (epsilon-greedy act()).
    _, a = _mlp_compute(x_ref, w1_ref, b1_ref, w2_ref, b2_ref)
    a_ref[...] = a


def _in_specs(TB):
    return [
        # x: unpadded (B, 4); last dim equals the full array dim -> legal block.
        pl.BlockSpec((TB, N_STATES), lambda i: (i, 0)),
        # Weights/biases: constant index_maps -> fetched once, resident in VMEM.
        pl.BlockSpec((N_STATES, HID_PAD), lambda i: (0, 0)),
        pl.BlockSpec((1, HID_PAD), lambda i: (0, 0)),
        pl.BlockSpec((HID_PAD, OUT_PAD), lambda i: (0, 0)),
        pl.BlockSpec((1, OUT_PAD), lambda i: (0, 0)),
    ]


def net_apply(x, w1p, b1p, w2p, b2p):
    """Forward + fused greedy action.

    Returns (q_pad (B, OUT_PAD) f32, actions (B, 1) int32). Q columns
    [N_ACTIONS:] are zero-weight padding; slice [:, :N_ACTIONS] for the exact
    PyTorch output (see net_forward).
    """
    x = x.astype(jnp.float32)
    B = x.shape[0]
    TB = _batch_tile(B)
    grid = (pl.cdiv(B, TB),)
    n_rows = grid[0] * TB

    flops = 2 * n_rows * (N_STATES * HID_PAD + HID_PAD * OUT_PAD)
    bytes_accessed = 4 * (x.size + w1p.size + b1p.size + w2p.size + b2p.size
                          + B * OUT_PAD + B)

    q_pad, a = pl.pallas_call(
        _fwd_kernel,
        out_shape=(
            jax.ShapeDtypeStruct((B, OUT_PAD), jnp.float32),
            jax.ShapeDtypeStruct((B, 1), jnp.int32),
        ),
        grid=grid,
        in_specs=_in_specs(TB),
        out_specs=(
            pl.BlockSpec((TB, OUT_PAD), lambda i: (i, 0)),
            pl.BlockSpec((TB, 1), lambda i: (i, 0)),
        ),
        compiler_params=pltpu.CompilerParams(
            dimension_semantics=("parallel",)),
        cost_estimate=pl.CostEstimate(
            flops=flops, transcendentals=0, bytes_accessed=bytes_accessed),
    )(x, w1p, b1p, w2p, b2p)
    return q_pad, a


def net_act(x, w1p, b1p, w2p, b2p):
    """Greedy action only (no Q writeback) — the DQN act() fast path."""
    x = x.astype(jnp.float32)
    B = x.shape[0]
    TB = _batch_tile(B)
    grid = (pl.cdiv(B, TB),)
    n_rows = grid[0] * TB

    flops = 2 * n_rows * (N_STATES * HID_PAD + HID_PAD * OUT_PAD)
    bytes_accessed = 4 * (x.size + w1p.size + b1p.size + w2p.size + b2p.size + B)

    a = pl.pallas_call(
        _act_kernel,
        out_shape=jax.ShapeDtypeStruct((B, 1), jnp.int32),
        grid=grid,
        in_specs=_in_specs(TB),
        out_specs=pl.BlockSpec((TB, 1), lambda i: (i, 0)),
        compiler_params=pltpu.CompilerParams(
            dimension_semantics=("parallel",)),
        cost_estimate=pl.CostEstimate(
            flops=flops, transcendentals=0, bytes_accessed=bytes_accessed),
    )(x, w1p, b1p, w2p, b2p)
    return a


def net_forward(x, w1p, b1p, w2p, b2p):
    """PyTorch-equivalent forward: Q-values of shape (B, N_ACTIONS)."""
    q_pad, _ = net_apply(x, w1p, b1p, w2p, b2p)
    return q_pad[:, :N_ACTIONS]


def init_params(key):
    """Matches the PyTorch __init__: weights ~ Normal(0, 0.1); biases use
    PyTorch's default Linear init (uniform in [-1/sqrt(fan_in), 1/sqrt(fan_in)]).
    Returns (padded params for the kernel, unpadded params for reference)."""
    k1, k2, k3, k4 = jax.random.split(key, 4)
    w1 = 0.1 * jax.random.normal(k1, (N_STATES, HIDDEN), jnp.float32)
    b1_bound = 1.0 / jnp.sqrt(jnp.float32(N_STATES))
    b1 = jax.random.uniform(k2, (1, HIDDEN), jnp.float32, -b1_bound, b1_bound)
    w2 = 0.1 * jax.random.normal(k3, (HIDDEN, N_ACTIONS), jnp.float32)
    b2_bound = 1.0 / jnp.sqrt(jnp.float32(HIDDEN))
    b2 = jax.random.uniform(k4, (1, N_ACTIONS), jnp.float32, -b2_bound, b2_bound)

    # Zero-pad only the hidden/output dims (zeros contribute nothing).
    w1p = jnp.zeros((N_STATES, HID_PAD), jnp.float32).at[:, :HIDDEN].set(w1)
    b1p = jnp.zeros((1, HID_PAD), jnp.float32).at[:, :HIDDEN].set(b1)
    w2p = jnp.zeros((HID_PAD, OUT_PAD), jnp.float32).at[:HIDDEN, :N_ACTIONS].set(w2)
    b2p = jnp.zeros((1, OUT_PAD), jnp.float32).at[:, :N_ACTIONS].set(b2)
    return (w1p, b1p, w2p, b2p), (w1, b1, w2, b2)


if __name__ == "__main__":
    key = jax.random.PRNGKey(0)
    kx, kp = jax.random.split(key)
    batch = 8
    x = jax.random.normal(kx, (batch, N_STATES), jnp.float32)
    (w1p, b1p, w2p, b2p), (w1, b1, w2, b2) = init_params(kp)

    # Training-forward path: Q values + fused greedy actions.
    q_pad, a = net_apply(x, w1p, b1p, w2p, b2p)
    q_pad = jax.block_until_ready(q_pad)
    a = jax.block_until_ready(a)

    ref = jnp.maximum(x @ w1 + b1, 0.0) @ w2 + b2
    q = q_pad[:, :N_ACTIONS]
    assert q.shape == (batch, N_ACTIONS)
    assert jnp.allclose(q, ref, atol=1e-5, rtol=1e-5)
    assert jnp.array_equal(a[:, 0], jnp.argmax(ref, axis=-1).astype(jnp.int32))

    # act() fast path: single state, action-only output (no Q writeback,
    # ragged batch handled by the clipped edge block).
    x1 = x[:1]
    a1 = jax.block_until_ready(net_act(x1, w1p, b1p, w2p, b2p))
    assert a1.shape == (1, 1)
    assert int(a1[0, 0]) == int(jnp.argmax(ref[0]))

    # TODO(synk): Adam optimizer / DQN training step are host-side and not
    # part of this forward kernel.
    print("KERNEL_OK")
</pallas_src>

<mosaic_0001>
module attributes {stable_mosaic.version = 11 : i64} {
  func.func @_fwd_kernel(%arg0: i32, %arg1: memref<8x4xf32, #tpu.memory_space<vmem>>, %arg2: memref<4x128xf32, #tpu.memory_space<vmem>>, %arg3: memref<1x128xf32, #tpu.memory_space<vmem>>, %arg4: memref<128x8xf32, #tpu.memory_space<vmem>>, %arg5: memref<1x8xf32, #tpu.memory_space<vmem>>, %arg6: memref<8x8xf32, #tpu.memory_space<vmem>>, %arg7: memref<8x1xi32, #tpu.memory_space<vmem>>) attributes {dimension_semantics = [#tpu.dimension_semantics<parallel>], iteration_bounds = array<i64: 1>, scalar_prefetch = 0 : i64, scratch_operands = 0 : i64, tpu.core_type = #tpu.core_type<tc>, window_params = [{transform_indices = @transform_0, window_bounds = array<i64: 8, 4>}, {pipeline_mode = #tpu.pipeline_mode<synchronous>, transform_indices = @transform_1, window_bounds = array<i64: 4, 128>}, {pipeline_mode = #tpu.pipeline_mode<synchronous>, transform_indices = @transform_2, window_bounds = array<i64: 1, 128>}, {pipeline_mode = #tpu.pipeline_mode<synchronous>, transform_indices = @transform_3, window_bounds = array<i64: 128, 8>}, {pipeline_mode = #tpu.pipeline_mode<synchronous>, transform_indices = @transform_4, window_bounds = array<i64: 1, 8>}, {transform_indices = @transform_5, window_bounds = array<i64: 8, 8>}, {transform_indices = @transform_6, window_bounds = array<i64: 8, 1>}]} {
    %c0 = arith.constant 0 : index
    %c0_0 = arith.constant 0 : index
    %0 = vector.load %arg1[%c0, %c0_0] : memref<8x4xf32, #tpu.memory_space<vmem>>, vector<8x4xf32>
    %c0_1 = arith.constant 0 : index
    %c0_2 = arith.constant 0 : index
    %1 = vector.load %arg2[%c0_1, %c0_2] : memref<4x128xf32, #tpu.memory_space<vmem>>, vector<4x128xf32>
    %cst = arith.constant dense<0.000000e+00> : vector<8x128xf32>
    %2 = tpu.matmul %0, %1, %cst {dimension_numbers = #tpu.dot_dimension_numbers<[1], [0], [0], [1], [0, 0, 1, 1], [], []>} : vector<8x4xf32>, vector<4x128xf32>, vector<8x128xf32> -> vector<8x128xf32>
    %c0_3 = arith.constant 0 : index
    %c0_4 = arith.constant 0 : index
    %3 = vector.load %arg3[%c0_3, %c0_4] : memref<1x128xf32, #tpu.memory_space<vmem>>, vector<1x128xf32>
    %4 = vector.broadcast %3 : vector<1x128xf32> to vector<8x128xf32>
    %5 = arith.addf %2, %4 : vector<8x128xf32>
    %cst_5 = arith.constant 0.000000e+00 : f32
    %6 = vector.broadcast %cst_5 : f32 to vector<8x128xf32>
    %7 = arith.maximumf %5, %6 : vector<8x128xf32>
    %c0_6 = arith.constant 0 : index
    %c0_7 = arith.constant 0 : index
    %8 = vector.load %arg4[%c0_6, %c0_7] : memref<128x8xf32, #tpu.memory_space<vmem>>, vector<128x8xf32>
    %cst_8 = arith.constant dense<0.000000e+00> : vector<8x8xf32>
    %9 = tpu.matmul %7, %8, %cst_8 {dimension_numbers = #tpu.dot_dimension_numbers<[1], [0], [0], [1], [0, 0, 1, 1], [], []>} : vector<8x128xf32>, vector<128x8xf32>, vector<8x8xf32> -> vector<8x8xf32>
    %c0_9 = arith.constant 0 : index
    %c0_10 = arith.constant 0 : index
    %10 = vector.load %arg5[%c0_9, %c0_10] : memref<1x8xf32, #tpu.memory_space<vmem>>, vector<1x8xf32>
    %11 = vector.broadcast %10 : vector<1x8xf32> to vector<8x8xf32>
    %12 = arith.addf %9, %11 : vector<8x8xf32>
    %13 = tpu.iota {dimensions = array<i32: 1>} : vector<8x8xi32>
    %c2_i32 = arith.constant 2 : i32
    %14 = vector.broadcast %c2_i32 : i32 to vector<8x8xi32>
    %15 = arith.cmpi slt, %13, %14 : vector<8x8xi32>
    %cst_11 = arith.constant 0xFF800000 : f32
    %16 = vector.broadcast %cst_11 : f32 to vector<8x8xf32>
    %17 = arith.select %15, %12, %16 : vector<8x8xi1>, vector<8x8xf32>
    %cst_12 = arith.constant dense<0xFF800000> : vector<8xf32>
    %18 = vector.multi_reduction <maximumf>, %17, %cst_12 [1] : vector<8x8xf32> to vector<8xf32>
    %19 = vector.shape_cast %18 : vector<8xf32> to vector<8x1xf32>
    %20 = vector.broadcast %19 : vector<8x1xf32> to vector<8x8xf32>
    %21 = arith.cmpf oge, %17, %20 : vector<8x8xf32>
    %22 = arith.andi %15, %21 : vector<8x8xi1>
    %c8_i32 = arith.constant 8 : i32
    %23 = vector.broadcast %c8_i32 : i32 to vector<8x8xi32>
    %24 = arith.select %22, %13, %23 : vector<8x8xi1>, vector<8x8xi32>
    %cst_13 = arith.constant dense<2147483647> : vector<8xi32>
    %25 = vector.multi_reduction <minsi>, %24, %cst_13 [1] : vector<8x8xi32> to vector<8xi32>
    %26 = vector.shape_cast %25 : vector<8xi32> to vector<8x1xi32>
    %c0_14 = arith.constant 0 : index
    %c0_15 = arith.constant 0 : index
    %27 = vector.load %arg6[%c0_14, %c0_15] : memref<8x8xf32, #tpu.memory_space<vmem>>, vector<8x8xf32>
    tpu.vector_store %arg6[%c0_14, %c0_15], %12 {strides = array<i32>} : memref<8x8xf32, #tpu.memory_space<vmem>>, vector<8x8xf32>,
    %c0_16 = arith.constant 0 : index
    %c0_17 = arith.constant 0 : index
    %28 = vector.load %arg7[%c0_16, %c0_17] : memref<8x1xi32, #tpu.memory_space<vmem>>, vector<8x1xi32>
    tpu.vector_store %arg7[%c0_16, %c0_17], %26 {strides = array<i32>} : memref<8x1xi32, #tpu.memory_space<vmem>>, vector<8x1xi32>,
    return
  }
  func.func @transform_0(%arg0: i32) -> (i32, i32) {
    %c0_i32 = arith.constant 0 : i32
    %c0_i32_0 = arith.constant 0 : i32
    return %arg0, %c0_i32 : i32, i32
  }
  func.func @transform_1(%arg0: i32) -> (i32, i32) {
    %c0_i32 = arith.constant 0 : i32
    %c0_i32_0 = arith.constant 0 : i32
    %c0_i32_1 = arith.constant 0 : i32
    return %c0_i32, %c0_i32_0 : i32, i32
  }
  func.func @transform_2(%arg0: i32) -> (i32, i32) {
    %c0_i32 = arith.constant 0 : i32
    %c0_i32_0 = arith.constant 0 : i32
    %c0_i32_1 = arith.constant 0 : i32
    return %c0_i32, %c0_i32_0 : i32, i32
  }
  func.func @transform_3(%arg0: i32) -> (i32, i32) {
    %c0_i32 = arith.constant 0 : i32
    %c0_i32_0 = arith.constant 0 : i32
    %c0_i32_1 = arith.constant 0 : i32
    return %c0_i32, %c0_i32_0 : i32, i32
  }
  func.func @transform_4(%arg0: i32) -> (i32, i32) {
    %c0_i32 = arith.constant 0 : i32
    %c0_i32_0 = arith.constant 0 : i32
    %c0_i32_1 = arith.constant 0 : i32
    return %c0_i32, %c0_i32_0 : i32, i32
  }
  func.func @transform_5(%arg0: i32) -> (i32, i32) {
    %c0_i32 = arith.constant 0 : i32
    %c0_i32_0 = arith.constant 0 : i32
    return %arg0, %c0_i32 : i32, i32
  }
  func.func @transform_6(%arg0: i32) -> (i32, i32) {
    %c0_i32 = arith.constant 0 : i32
    %c0_i32_0 = arith.constant 0 : i32
    return %arg0, %c0_i32 : i32, i32
  }
}

</mosaic_0001>

<llo_original>
// kernel: tpu_custom_call.1
$region0: #{tpu_custom_call.1}
  #allocation0 [shape = 'u32[]', space=smem, size = 0x4, offset = 0x4, fixed_abs, tag = 'smem constant byte address 0x4 - core index']
  #allocation1 [shape = 'u32[144,128]{1,0:T(1,128)}', space=vmem, size = 0x12000, scoped, tag = 'internal scratch']
  %s0 = inlined_call_operand.vmem [shape: f32[8,4], index: 0, kind: input, shape index: {}]
  %s1 = inlined_call_operand.vmem [shape: f32[4,128], index: 1, kind: input, shape index: {}]
  %s2 = inlined_call_operand.vmem [shape: f32[1,128], index: 2, kind: input, shape index: {}]
  %s3 = inlined_call_operand.vmem [shape: f32[128,8], index: 3, kind: input, shape index: {}]
  %s4 = inlined_call_operand.vmem [shape: f32[1,8], index: 4, kind: input, shape index: {}]
  %s5 = inlined_call_operand.hbm [shape: f32[8,8], index: 5, kind: output, shape index: {0}]
  %s6 = inlined_call_operand.vmem [shape: s32[8,1], index: 6, kind: output, shape index: {1}]
  %7 = xla_tuple %s5, %s6
  %s8 = sld [smem:[#allocation0]]
  $region38: #{tpu_custom_call.1} parent=0
    _
  %s10 = ssub.s32 1, %s8
  %s11 = scalar_select 0, %s10, %s8
  $region1: #{tpu_custom_call.1} parent=0
    #allocation2 [shape = 'u8[4096]{0}', space=vmem, size = 0x1000, scoped, tag = 'output window, operand 0, single buffered']
    #allocation3 [shape = 's32[1]{0}', space=sflag, size = 0x4, scoped, tag = 'scoped memory for tpu_custom_call.1']
    %12 = vsyncpa [#allocation3], 0
    // Predicated region
    $region2: #{tpu_custom_call.1} parent=1 // pred_check
      _
    $region3: #{tpu_custom_call.1} parent=1 // pred_check_branch
      %14 = sbr.rel (0) target = $region5
    $region4: #{tpu_custom_call.1} parent=1 // pred_region
      _
    $region5: #{tpu_custom_call.1} parent=1 // pred_fallthru
      _
    // Predicated region
    $region6: #{tpu_custom_call.1} parent=1 // pred_check
      _
    $region7: #{tpu_custom_call.1} parent=1 // pred_check_branch
      %16 = sbr.rel (0) target = $region9
    $region8: #{tpu_custom_call.1} parent=1 // pred_region
      _
    $region9: #{tpu_custom_call.1} parent=1 // pred_fallthru
      _
    // Predicated region
    $region10: #{tpu_custom_call.1} parent=1 // pred_check
      _
    $region11: #{tpu_custom_call.1} parent=1 // pred_check_branch
      %18 = sbr.rel (0) target = $region13
    $region12: #{tpu_custom_call.1} parent=1 // pred_region
      _
    $region13: #{tpu_custom_call.1} parent=1 // pred_fallthru
      _
    // Predicated region
    $region14: #{tpu_custom_call.1} parent=1 // pred_check
      _
    $region15: #{tpu_custom_call.1} parent=1 // pred_check_branch
      %20 = sbr.rel (0) target = $region17
    $region16: #{tpu_custom_call.1} parent=1 // pred_region
      _
    $region17: #{tpu_custom_call.1} parent=1 // pred_fallthru
      _
    // Predicated region
    $region18: #{tpu_custom_call.1} parent=1 // pred_check
      _
    $region19: #{tpu_custom_call.1} parent=1 // pred_check_branch
      %22 = sbr.rel (0) target = $region21
    $region20: #{tpu_custom_call.1} parent=1 // pred_region
      _
    $region21: #{tpu_custom_call.1} parent=1 // pred_fallthru
      _
    %v23 = vld [vmem:[%s0] sm:$0xff]
    %v24 = vld [vmem:[%s1] sm:$0xf]
    %v25 = vld [vmem:[%s2] sm:$0x1]
    %v27 = vlaneseq
    %v28 = vshrl.u32 %v27, 7
    %v29 = vsub.s32 0, %v28
    %v30 = vrot.slane %v25, %v29
    %vm32 = vcmask 31744
    %v34 = vsel %vm32, %v23, 0
    %vm36 = vcmask 1043456
    %v38 = vsel %vm36, %v24, 0
    %40 = vmatprep.subr.mxu0 0.0
    %41 = vmatpush1.msra.mxu0 %v38
    %42 = vmatprep.subr.mxu0 0.0
    %43 = vmatpush1.msra.mxu0 0.0
    %44 = vmatprep.subr.mxu0 0.0
    %45 = vmatpush1.msra.mxu0 0.0
    %46 = vmatprep.subr.mxu0 0.0
    %47 = vmatpush1.msra.mxu0 0.0
    %48 = vmatprep.subr.mxu0 0.0
    %49 = vmatpush1.msra.mxu0 0.0
    %50 = vmatprep.subr.mxu0 0.0
    %51 = vmatpush1.msra.mxu0 0.0
    %52 = vmatprep.subr.mxu0 0.0
    %53 = vmatpush1.msra.mxu0 0.0
    %54 = vmatprep.subr.mxu0 0.0
    %55 = vmatpush1.msra.mxu0 0.0
    %56 = vmatprep.subr.mxu0 0.0
    %57 = vmatpush1.msra.mxu0 0.0
    %58 = vmatprep.subr.mxu0 0.0
    %59 = vmatpush1.msra.mxu0 0.0
    %60 = vmatprep.subr.mxu0 0.0
    %61 = vmatpush1.msra.mxu0 0.0
    %62 = vmatprep.subr.mxu0 0.0
    %63 = vmatpush1.msra.mxu0 0.0
    %64 = vmatprep.subr.mxu0 0.0
    %65 = vmatpush1.msra.mxu0 0.0
    %66 = vmatprep.subr.mxu0 0.0
    %67 = vmatpush1.msra.mxu0 0.0
    %68 = vmatprep.subr.mxu0 0.0
    %69 = vmatpush1.msra.mxu0 0.0
    %70 = vmatprep.subr.mxu0 0.0
    %71 = vmatpush1.msra.mxu0 0.0
    %72 = vmatprep.subr.mxu0 0.0
    %73 = vmatpush1.msra.mxu0 0.0
    %74 = vmatprep.subr.mxu0 0.0
    %75 = vmatpush1.msra.mxu0 0.0
    %76 = vmatprep.subr.mxu0 0.0
    %77 = vmatpush1.msra.mxu0 0.0
    %78 = vmatprep.subr.mxu0 0.0
    %79 = vmatpush1.msra.mxu0 0.0
    %80 = vmatprep.subr.mxu0 0.0
    %81 = vmatpush1.msra.mxu0 0.0
    %82 = vmatprep.subr.mxu0 0.0
    %83 = vmatpush1.msra.mxu0 0.0
    %84 = vmatprep.subr.mxu0 0.0
    %85 = vmatpush1.msra.mxu0 0.0
    %86 = vmatprep.subr.mxu0 0.0
    %87 = vmatpush1.msra.mxu0 0.0
    %88 = vmatprep.subr.mxu0 0.0
    %89 = vmatpush1.msra.mxu0 0.0
    %90 = vmatprep.subr.mxu0 0.0
    %91 = vmatpush1.msra.mxu0 0.0
    %92 = vmatprep.subr.mxu0 0.0
    %93 = vmatpush1.msra.mxu0 0.0
    %94 = vmatprep.subr.mxu0 0.0
    %95 = vmatpush1.msra.mxu0 0.0
    %96 = vmatprep.subr.mxu0 0.0
    %97 = vmatpush1.msra.mxu0 0.0
    %98 = vmatprep.subr.mxu0 0.0
    %99 = vmatpush1.msra.mxu0 0.0
    %100 = vmatprep.subr.mxu0 0.0
    %101 = vmatpush1.msra.mxu0 0.0
    %102 = vmatprep.subr.mxu0 0.0
    %103 = vmatpush1.msra.mxu0 0.0
    %104 = vmatprep.mubr.f32.mxu0 0.0
    %105 = vmatmul.mubr.f32.gmra.mrb[0].mxu0 %v34
    %v106 = vpop.f32.mrb[0].mxu0
    %v107 = vadd.f32 %v30, %v106
    %v108 = vpop.f32.mrb[0].mxu0
    %109 = vdwg.mxu0
    %v110 = vmax.f32 %v107, 0.0
    %v111 = vld [vmem:[%s3] sm:$0xff]
    %v112 = vld [vmem:[%s3 + $0x8] sm:$0xff]
    %v113 = vld [vmem:[%s3 + $0x10] sm:$0xff]
    %v114 = vld [vmem:[%s3 + $0x18] sm:$0xff]
    %v115 = vld [vmem:[%s3 + $0x20] sm:$0xff]
    %v116 = vld [vmem:[%s3 + $0x28] sm:$0xff]
    %v117 = vld [vmem:[%s3 + $0x30] sm:$0xff]
    %v118 = vld [vmem:[%s3 + $0x38] sm:$0xff]
    %v119 = vld [vmem:[%s3 + $0x40] sm:$0xff]
    %v120 = vld [vmem:[%s3 + $0x48] sm:$0xff]
    %v121 = vld [vmem:[%s3 + $0x50] sm:$0xff]
    %v122 = vld [vmem:[%s3 + $0x58] sm:$0xff]
    %v123 = vld [vmem:[%s3 + $0x60] sm:$0xff]
    %v124 = vld [vmem:[%s3 + $0x68] sm:$0xff]
    %v125 = vld [vmem:[%s3 + $0x70] sm:$0xff]
    %v126 = vld [vmem:[%s3 + $0x78] sm:$0xff]
    %v127 = vld [vmem:[%s4] sm:$0x1]
    %v129 = vlaneseq
    %v130 = vshrl.u32 %v129, 7
    %v131 = vsub.s32 0, %v130
    %v132 = vrot.slane %v127, %v131
    %134 = vmatprep.subr.mxu0 0.0
    %135 = vmatpush1.msra.mxu0 %v111
    %136 = vmatprep.subr.mxu0 0.0
    %137 = vmatpush1.msra.mxu0 %v112
    %138 = vmatprep.subr.mxu0 0.0
    %139 = vmatpush1.msra.mxu0 %v113
    %140 = vmatprep.subr.mxu0 0.0
    %141 = vmatpush1.msra.mxu0 %v114
    %142 = vmatprep.subr.mxu0 0.0
    %143 = vmatpush1.msra.mxu0 %v115
    %144 = vmatprep.subr.mxu0 0.0
    %145 = vmatpush1.msra.mxu0 %v116
    %146 = vmatprep.subr.mxu0 0.0
    %147 = vmatpush1.msra.mxu0 %v117
    %148 = vmatprep.subr.mxu0 0.0
    %149 = vmatpush1.msra.mxu0 %v118
    %150 = vmatprep.subr.mxu0 0.0
    %151 = vmatpush1.msra.mxu0 %v119
    %152 = vmatprep.subr.mxu0 0.0
    %153 = vmatpush1.msra.mxu0 %v120
    %154 = vmatprep.subr.mxu0 0.0
    %155 = vmatpush1.msra.mxu0 %v121
    %156 = vmatprep.subr.mxu0 0.0
    %157 = vmatpush1.msra.mxu0 %v122
    %158 = vmatprep.subr.mxu0 0.0
    %159 = vmatpush1.msra.mxu0 %v123
    %160 = vmatprep.subr.mxu0 0.0
    %161 = vmatpush1.msra.mxu0 %v124
    %162 = vmatprep.subr.mxu0 0.0
    %163 = vmatpush1.msra.mxu0 %v125
    %164 = vmatprep.subr.mxu0 0.0
    %165 = vmatpush1.msra.mxu0 %v126
    %166 = vmatprep.subr.mxu0 0.0
    %167 = vmatpush1.msra.mxu0 0.0
    %168 = vmatprep.subr.mxu0 0.0
    %169 = vmatpush1.msra.mxu0 0.0
    %170 = vmatprep.subr.mxu0 0.0
    %171 = vmatpush1.msra.mxu0 0.0
    %172 = vmatprep.subr.mxu0 0.0
    %173 = vmatpush1.msra.mxu0 0.0
    %174 = vmatprep.subr.mxu0 0.0
    %175 = vmatpush1.msra.mxu0 0.0
    %176 = vmatprep.subr.mxu0 0.0
    %177 = vmatpush1.msra.mxu0 0.0
    %178 = vmatprep.subr.mxu0 0.0
    %179 = vmatpush1.msra.mxu0 0.0
    %180 = vmatprep.subr.mxu0 0.0
    %181 = vmatpush1.msra.mxu0 0.0
    %182 = vmatprep.subr.mxu0 0.0
    %183 = vmatpush1.msra.mxu0 0.0
    %184 = vmatprep.subr.mxu0 0.0
    %185 = vmatpush1.msra.mxu0 0.0
    %186 = vmatprep.subr.mxu0 0.0
    %187 = vmatpush1.msra.mxu0 0.0
    %188 = vmatprep.subr.mxu0 0.0
    %189 = vmatpush1.msra.mxu0 0.0
    %190 = vmatprep.subr.mxu0 0.0
    %191 = vmatpush1.msra.mxu0 0.0
    %192 = vmatprep.subr.mxu0 0.0
    %193 = vmatpush1.msra.mxu0 0.0
    %194 = vmatprep.subr.mxu0 0.0
    %195 = vmatpush1.msra.mxu0 0.0
    %196 = vmatprep.subr.mxu0 0.0
    %197 = vmatpush1.msra.mxu0 0.0
    %198 = vmatprep.mubr.f32.mxu0 0.0
    %199 = vmatmul.mubr.f32.gmra.mrb[0].mxu0 %v110
    %v200 = vpop.f32.mrb[0].mxu0
    %v201 = vadd.f32 %v132, %v200
    %v202 = vpop.f32.mrb[0].mxu0
    %203 = vdwg.mxu0
    %v204 = vlaneseq
    %v205 = vand.u32 %v204, 127
    %vm206 = vcmp.lt.s32.totalorder %v205, 2
    %v207 = vsel %vm206, %v201, -inf
    %vm208 = vcmask 64512
    %v209 = vsel %vm208, %v207, -inf
    %210 = vmax.xlane.f32.xlu0 %v209
    %v211 = vpop.xlane.xlu0 %210
    %vm212 = vcmp.ge.f32.partialorder %v207, %v211
    %vm213 = vmand %vm206, %vm212
    %v214 = vsel %vm213, %v205, 8
    %v215 = vsel %vm208, %v214, 2147483647
    %v216 = vand.u32 %v215, 65535
    %v217 = vshra.s32 %v215, 16
    %v218 = vcvt.s32.f32 %v216
    %v219 = vcvt.s32.f32 %v217
    %220 = vmin.xlane.f32.xlu0 %v219
    %v221 = vpop.xlane.xlu0 %220
    %vm222 = vcmp.eq.f32.partialorder %v219, %v221
    %v223 = vsel %vm222, %v218, inf
    %224 = vmin.xlane.f32.xlu0 %v223
    %v225 = vpop.xlane.xlu0 %224
    %v226 = vcvt.f32.s32 %v225
    %v227 = vcvt.f32.s32 %v221
    %v228 = vshll.u32 %v227, 16
    %v229 = vadd.s32 %v228, %v226
    %230 = vst.msk [vmem:[#allocation2] sm:$0xff] %vm208, %v201
    %vm231 = vcmask 7168
    %232 = vst.msk [vmem:[%s6] sm:$0xff] %vm231, %v229
    // Predicated region
    $region22: #{tpu_custom_call.1} parent=1 // pred_check
      _
    $region23: #{tpu_custom_call.1} parent=1 // pred_check_branch
      %234 = sbr.rel (0) target = $region25
    $region24: #{tpu_custom_call.1} parent=1 // pred_region
      %s236 = ssub.s32 128, 128
      %237 = vsyncadd [#allocation3], %s236
      %s239 = sshll.u32 [#allocation2], 4
      %s240 = int_to_ptr.vmem [resolvable:$true] %s239
      %242 = dma.vmem_to_hbm [thread:$0]  %s240, 128, %s5, [#allocation3]
    $region25: #{tpu_custom_call.1} parent=1 // pred_fallthru
      _
    // Predicated region
    $region26: #{tpu_custom_call.1} parent=1 // pred_check
      _
    $region27: #{tpu_custom_call.1} parent=1 // pred_check_branch
      %244 = sbr.rel (0) target = $region29
    $region28: #{tpu_custom_call.1} parent=1 // pred_region
      _
    $region29: #{tpu_custom_call.1} parent=1 // pred_fallthru
      _
    // Predicated region
    $region30: #{tpu_custom_call.1} parent=1 // pred_check
      _
    $region31: #{tpu_custom_call.1} parent=1 // pred_check_branch
      %246 = sbr.rel (0) target = $region33
    $region32: #{tpu_custom_call.1} parent=1 // pred_region
      %247 = dma.done [#allocation3], 128
    $region33: #{tpu_custom_call.1} parent=1 // pred_fallthru
      _
    // Predicated region
    $region34: #{tpu_custom_call.1} parent=1 // pred_check
      _
    $region35: #{tpu_custom_call.1} parent=1 // pred_check_branch
      %249 = sbr.rel (0) target = $region37
    $region36: #{tpu_custom_call.1} parent=1 // pred_region
      _
    $region37: #{tpu_custom_call.1} parent=1 // pred_fallthru
      _
    %250 = vsyncpa [#allocation3], 1

</llo_original>
